<compile_context>
chip_gen: v7x
topology: tpu7x:2x2x1
jax: 0.10.0
libtpu: 0.0.40
codegen_flags: <defaults>
</compile_context>

<pallas_src>
import jax
import jax.numpy as jnp
from jax.experimental import pallas as pl
from jax.experimental.pallas import tpu as pltpu

EPS = 1e-07

# Per-grid-step budget for the (x + y) tiles (double-buffering handled via the
# vmem limit below).  8 MiB/step -> ~32 MiB resident, fits all generations.
_PER_STEP_BUDGET_BYTES = 8 * 1024 * 1024


def _choose_tb(B, L, C, itemsize):
    """Largest divisor of B whose (x + y) tile fits the per-step budget,
    preferring >= 2 grid steps so both v7x TensorCores get work."""
    per_row = 2 * L * C * itemsize
    divisors = [d for d in range(1, B + 1) if B % d == 0]
    fits = [d for d in divisors if d * per_row <= _PER_STEP_BUDGET_BYTES] or [1]
    multi = [d for d in fits if B // d >= 2]
    return max(multi) if multi else max(fits)


def _vmem_limit_bytes(TB, L, C, itemsize):
    tile = TB * L * C * itemsize          # one x or y tile
    stats = TB * C * 4                    # one (TB,1,C) f32 stat tile
    need = 4 * tile + 8 * stats + (2 << 20)   # dbl-buffered in+out + margin
    return int(min(48 << 20, max(need, 8 << 20)))


# ---------------------------------------------------------------- norm kernel
def _revin_norm_kernel(x_ref, w_ref, b_ref, y_ref, mean_ref, std_ref):
    # x_ref: (TB, L, C) block; w_ref/b_ref: (1, 1, C)
    x = x_ref[...].astype(jnp.float32)                      # (TB, L, C)
    inv_l = jnp.float32(1.0 / x.shape[1])

    # Single-pass moments in f32 (one sweep over the tile).
    s1 = jnp.sum(x, axis=1, keepdims=True)                  # (TB, 1, C)
    s2 = jnp.sum(x * x, axis=1, keepdims=True)              # (TB, 1, C)
    mean = s1 * inv_l
    var = jnp.maximum(s2 * inv_l - mean * mean, 0.0)        # unbiased=False
    std = jnp.sqrt(var + EPS)                               # (TB, 1, C)

    w = w_ref[...].astype(jnp.float32)                      # (1, 1, C)
    b = b_ref[...].astype(jnp.float32)                      # (1, 1, C)

    # Fold ((x - mean) / (std + eps)) * w + b into one mul+add per element.
    scale = w / (std + EPS)                                 # (TB, 1, C)
    shift = b - mean * scale                                # (TB, 1, C)

    y_ref[...] = (x * scale + shift).astype(y_ref.dtype)
    mean_ref[...] = mean.astype(mean_ref.dtype)
    std_ref[...] = std.astype(std_ref.dtype)


def revin_norm(x, weight, bias):
    """x: (B, L, C); weight, bias: (C,). Returns (y, mean, stdev)."""
    B, L, C = x.shape
    itemsize = jnp.dtype(x.dtype).itemsize
    TB = _choose_tb(B, L, C, itemsize)
    w3 = weight.reshape(1, 1, C)
    b3 = bias.reshape(1, 1, C)
    # TODO(synk): for very small C a channels-dense (B, C, L) layout would be
    # lane-dense and faster, but only if the surrounding model hands over that
    # layout (an extra XLA transpose would be a full HBM pass and eat the win).
    return pl.pallas_call(
        _revin_norm_kernel,
        out_shape=(
            jax.ShapeDtypeStruct((B, L, C), x.dtype),
            jax.ShapeDtypeStruct((B, 1, C), jnp.float32),
            jax.ShapeDtypeStruct((B, 1, C), jnp.float32),
        ),
        grid_spec=pltpu.PrefetchScalarGridSpec(
            num_scalar_prefetch=0,
            grid=(B // TB,),
            in_specs=[
                pl.BlockSpec((TB, L, C), lambda i: (i, 0, 0)),
                pl.BlockSpec((1, 1, C), lambda i: (0, 0, 0)),
                pl.BlockSpec((1, 1, C), lambda i: (0, 0, 0)),
            ],
            out_specs=[
                pl.BlockSpec((TB, L, C), lambda i: (i, 0, 0)),
                pl.BlockSpec((TB, 1, C), lambda i: (i, 0, 0)),
                pl.BlockSpec((TB, 1, C), lambda i: (i, 0, 0)),
            ],
        ),
        compiler_params=pltpu.CompilerParams(
            dimension_semantics=("parallel",),
            vmem_limit_bytes=_vmem_limit_bytes(TB, L, C, itemsize),
        ),
    )(x, w3, b3)


# -------------------------------------------------------------- denorm kernel
def _revin_denorm_kernel(x_ref, mean_ref, std_ref, w_ref, b_ref, y_ref):
    x = x_ref[...].astype(jnp.float32)                      # (TB, L, C)
    mean = mean_ref[...].astype(jnp.float32)                # (TB, 1, C)
    std = std_ref[...].astype(jnp.float32)                  # (TB, 1, C)
    w = w_ref[...].astype(jnp.float32)                      # (1, 1, C)
    b = b_ref[...].astype(jnp.float32)                      # (1, 1, C)

    # Fold ((x - b) / (w + eps^2)) * std + mean into one mul+add per element.
    s = std / (w + EPS ** 2)                                # (TB, 1, C)
    shift = mean - b * s                                    # (TB, 1, C)
    y_ref[...] = (x * s + shift).astype(y_ref.dtype)


def revin_denorm(x, mean, stdev, weight, bias):
    """x: (B, L, C); mean, stdev: (B, 1, C); weight, bias: (C,)."""
    B, L, C = x.shape
    itemsize = jnp.dtype(x.dtype).itemsize
    TB = _choose_tb(B, L, C, itemsize)
    w3 = weight.reshape(1, 1, C)
    b3 = bias.reshape(1, 1, C)
    return pl.pallas_call(
        _revin_denorm_kernel,
        out_shape=jax.ShapeDtypeStruct((B, L, C), x.dtype),
        grid_spec=pltpu.PrefetchScalarGridSpec(
            num_scalar_prefetch=0,
            grid=(B // TB,),
            in_specs=[
                pl.BlockSpec((TB, L, C), lambda i: (i, 0, 0)),
                pl.BlockSpec((TB, 1, C), lambda i: (i, 0, 0)),
                pl.BlockSpec((TB, 1, C), lambda i: (i, 0, 0)),
                pl.BlockSpec((1, 1, C), lambda i: (0, 0, 0)),
                pl.BlockSpec((1, 1, C), lambda i: (0, 0, 0)),
            ],
            out_specs=pl.BlockSpec((TB, L, C), lambda i: (i, 0, 0)),
        ),
        compiler_params=pltpu.CompilerParams(
            dimension_semantics=("parallel",),
            vmem_limit_bytes=_vmem_limit_bytes(TB, L, C, itemsize),
        ),
    )(x, mean, stdev, w3, b3)


# ---------------------------------------------------------------- module glue
class RevINPallas:
    """Stateful wrapper mirroring the PyTorch RevIN forward(x, mode)."""

    def __init__(self, num_features, eps=EPS):
        self.num_features = num_features
        self.eps = eps
        # Deterministic init, matching nn.Parameter(torch.ones / torch.zeros).
        self.affine_weight = jnp.ones((num_features,), dtype=jnp.float32)
        self.affine_bias = jnp.zeros((num_features,), dtype=jnp.float32)
        self.mean = None
        self.stdev = None

    def __call__(self, x, mode):
        if mode == 'norm':
            y, mean, stdev = revin_norm(x, self.affine_weight, self.affine_bias)
            self.mean = mean
            self.stdev = stdev
            return y
        elif mode == 'denorm':
            return revin_denorm(x, self.mean, self.stdev,
                                self.affine_weight, self.affine_bias)
        else:
            raise NotImplementedError


# ------------------------------------------------------------------ reference
def _ref_norm(x, w, b):
    mean = jnp.mean(x, axis=1, keepdims=True)
    var = jnp.var(x, axis=1, keepdims=True)
    stdev = jnp.sqrt(var + EPS)
    y = (x - mean) / (stdev + EPS)
    return y * w + b, mean, stdev


def _ref_denorm(x, mean, stdev, w, b):
    y = (x - b) / (w + EPS ** 2)
    return y * stdev + mean


if __name__ == "__main__":
    key = jax.random.PRNGKey(0)
    B, L, C = 4, 32, 8   # batch, seq_len, num_features
    x = jax.random.normal(key, (B, L, C), dtype=jnp.float32) * 3.0 + 1.5

    model = RevINPallas(num_features=C)

    # norm pass
    y = model(x, 'norm')
    jax.block_until_ready(y)

    # denorm pass on the normalized output should reconstruct x
    x_rec = model(y, 'denorm')
    jax.block_until_ready(x_rec)

    # correctness check vs pure-JAX reference
    y_ref, mean_ref, std_ref = _ref_norm(x, model.affine_weight, model.affine_bias)
    xr_ref = _ref_denorm(y_ref, mean_ref, std_ref,
                         model.affine_weight, model.affine_bias)

    assert jnp.allclose(y, y_ref, atol=1e-5, rtol=1e-5)
    assert jnp.allclose(model.mean[:, 0, :], mean_ref[:, 0, :], atol=1e-5)
    assert jnp.allclose(model.stdev[:, 0, :], std_ref[:, 0, :], atol=1e-5)
    assert jnp.allclose(x_rec, xr_ref, atol=1e-5, rtol=1e-5)
    assert jnp.allclose(x_rec, x, atol=1e-3, rtol=1e-3)

    print("KERNEL_OK")
</pallas_src>

<mosaic_0001>
module attributes {stable_mosaic.version = 11 : i64} {
  func.func @_revin_norm_kernel(%arg0: i32, %arg1: memref<2x32x8xf32, #tpu.memory_space<vmem>>, %arg2: memref<1x1x8xf32, #tpu.memory_space<vmem>>, %arg3: memref<1x1x8xf32, #tpu.memory_space<vmem>>, %arg4: memref<2x32x8xf32, #tpu.memory_space<vmem>>, %arg5: memref<2x1x8xf32, #tpu.memory_space<vmem>>, %arg6: memref<2x1x8xf32, #tpu.memory_space<vmem>>) attributes {dimension_semantics = [#tpu.dimension_semantics<parallel>], iteration_bounds = array<i64: 2>, scalar_prefetch = 0 : i64, scratch_operands = 0 : i64, tpu.core_type = #tpu.core_type<tc>, window_params = [{transform_indices = @transform_0, window_bounds = array<i64: 2, 32, 8>}, {pipeline_mode = #tpu.pipeline_mode<synchronous>, transform_indices = @transform_1, window_bounds = array<i64: 1, 1, 8>}, {pipeline_mode = #tpu.pipeline_mode<synchronous>, transform_indices = @transform_2, window_bounds = array<i64: 1, 1, 8>}, {transform_indices = @transform_3, window_bounds = array<i64: 2, 32, 8>}, {transform_indices = @transform_4, window_bounds = array<i64: 2, 1, 8>}, {transform_indices = @transform_5, window_bounds = array<i64: 2, 1, 8>}]} {
    %c0 = arith.constant 0 : index
    %c0_0 = arith.constant 0 : index
    %c0_1 = arith.constant 0 : index
    %0 = vector.load %arg1[%c0, %c0_0, %c0_1] : memref<2x32x8xf32, #tpu.memory_space<vmem>>, vector<2x32x8xf32>
    %cst = arith.constant dense<0.000000e+00> : vector<2x8xf32>
    %1 = vector.multi_reduction <add>, %0, %cst [1] : vector<2x32x8xf32> to vector<2x8xf32>
    %2 = vector.shape_cast %1 : vector<2x8xf32> to vector<2x1x8xf32>
    %3 = arith.mulf %0, %0 : vector<2x32x8xf32>
    %cst_2 = arith.constant dense<0.000000e+00> : vector<2x8xf32>
    %4 = vector.multi_reduction <add>, %3, %cst_2 [1] : vector<2x32x8xf32> to vector<2x8xf32>
    %5 = vector.shape_cast %4 : vector<2x8xf32> to vector<2x1x8xf32>
    %cst_3 = arith.constant 3.125000e-02 : f32
    %6 = vector.broadcast %cst_3 : f32 to vector<2x1x8xf32>
    %7 = arith.mulf %2, %6 : vector<2x1x8xf32>
    %cst_4 = arith.constant 3.125000e-02 : f32
    %8 = vector.broadcast %cst_4 : f32 to vector<2x1x8xf32>
    %9 = arith.mulf %5, %8 : vector<2x1x8xf32>
    %10 = arith.mulf %7, %7 : vector<2x1x8xf32>
    %11 = arith.subf %9, %10 : vector<2x1x8xf32>
    %cst_5 = arith.constant 0.000000e+00 : f32
    %12 = vector.broadcast %cst_5 : f32 to vector<2x1x8xf32>
    %13 = arith.maximumf %11, %12 : vector<2x1x8xf32>
    %cst_6 = arith.constant 1.000000e-07 : f32
    %14 = vector.broadcast %cst_6 : f32 to vector<2x1x8xf32>
    %15 = arith.addf %13, %14 : vector<2x1x8xf32>
    %16 = math.sqrt %15 : vector<2x1x8xf32>
    %c0_7 = arith.constant 0 : index
    %c0_8 = arith.constant 0 : index
    %c0_9 = arith.constant 0 : index
    %17 = vector.load %arg2[%c0_7, %c0_8, %c0_9] : memref<1x1x8xf32, #tpu.memory_space<vmem>>, vector<1x1x8xf32>
    %c0_10 = arith.constant 0 : index
    %c0_11 = arith.constant 0 : index
    %c0_12 = arith.constant 0 : index
    %18 = vector.load %arg3[%c0_10, %c0_11, %c0_12] : memref<1x1x8xf32, #tpu.memory_space<vmem>>, vector<1x1x8xf32>
    %cst_13 = arith.constant 1.000000e-07 : f32
    %19 = vector.broadcast %cst_13 : f32 to vector<2x1x8xf32>
    %20 = arith.addf %16, %19 : vector<2x1x8xf32>
    %21 = vector.broadcast %17 : vector<1x1x8xf32> to vector<2x1x8xf32>
    %22 = arith.divf %21, %20 : vector<2x1x8xf32>
    %23 = arith.mulf %7, %22 : vector<2x1x8xf32>
    %24 = vector.broadcast %18 : vector<1x1x8xf32> to vector<2x1x8xf32>
    %25 = arith.subf %24, %23 : vector<2x1x8xf32>
    %26 = vector.broadcast %22 : vector<2x1x8xf32> to vector<2x32x8xf32>
    %27 = arith.mulf %0, %26 : vector<2x32x8xf32>
    %28 = vector.broadcast %25 : vector<2x1x8xf32> to vector<2x32x8xf32>
    %29 = arith.addf %27, %28 : vector<2x32x8xf32>
    %c0_14 = arith.constant 0 : index
    %c0_15 = arith.constant 0 : index
    %c0_16 = arith.constant 0 : index
    %30 = vector.load %arg4[%c0_14, %c0_15, %c0_16] : memref<2x32x8xf32, #tpu.memory_space<vmem>>, vector<2x32x8xf32>
    tpu.vector_store %arg4[%c0_14, %c0_15, %c0_16], %29 {strides = array<i32>} : memref<2x32x8xf32, #tpu.memory_space<vmem>>, vector<2x32x8xf32>,
    %c0_17 = arith.constant 0 : index
    %c0_18 = arith.constant 0 : index
    %c0_19 = arith.constant 0 : index
    %31 = vector.load %arg5[%c0_17, %c0_18, %c0_19] : memref<2x1x8xf32, #tpu.memory_space<vmem>>, vector<2x1x8xf32>
    tpu.vector_store %arg5[%c0_17, %c0_18, %c0_19], %7 {strides = array<i32>} : memref<2x1x8xf32, #tpu.memory_space<vmem>>, vector<2x1x8xf32>,
    %c0_20 = arith.constant 0 : index
    %c0_21 = arith.constant 0 : index
    %c0_22 = arith.constant 0 : index
    %32 = vector.load %arg6[%c0_20, %c0_21, %c0_22] : memref<2x1x8xf32, #tpu.memory_space<vmem>>, vector<2x1x8xf32>
    tpu.vector_store %arg6[%c0_20, %c0_21, %c0_22], %16 {strides = array<i32>} : memref<2x1x8xf32, #tpu.memory_space<vmem>>, vector<2x1x8xf32>,
    return
  }
  func.func @transform_0(%arg0: i32) -> (i32, i32, i32) {
    %c0_i32 = arith.constant 0 : i32
    %c0_i32_0 = arith.constant 0 : i32
    %c0_i32_1 = arith.constant 0 : i32
    return %arg0, %c0_i32, %c0_i32_0 : i32, i32, i32
  }
  func.func @transform_1(%arg0: i32) -> (i32, i32, i32) {
    %c0_i32 = arith.constant 0 : i32
    %c0_i32_0 = arith.constant 0 : i32
    %c0_i32_1 = arith.constant 0 : i32
    %c0_i32_2 = arith.constant 0 : i32
    return %c0_i32, %c0_i32_0, %c0_i32_1 : i32, i32, i32
  }
  func.func @transform_2(%arg0: i32) -> (i32, i32, i32) {
    %c0_i32 = arith.constant 0 : i32
    %c0_i32_0 = arith.constant 0 : i32
    %c0_i32_1 = arith.constant 0 : i32
    %c0_i32_2 = arith.constant 0 : i32
    return %c0_i32, %c0_i32_0, %c0_i32_1 : i32, i32, i32
  }
  func.func @transform_3(%arg0: i32) -> (i32, i32, i32) {
    %c0_i32 = arith.constant 0 : i32
    %c0_i32_0 = arith.constant 0 : i32
    %c0_i32_1 = arith.constant 0 : i32
    return %arg0, %c0_i32, %c0_i32_0 : i32, i32, i32
  }
  func.func @transform_4(%arg0: i32) -> (i32, i32, i32) {
    %c0_i32 = arith.constant 0 : i32
    %c0_i32_0 = arith.constant 0 : i32
    %c0_i32_1 = arith.constant 0 : i32
    return %arg0, %c0_i32, %c0_i32_0 : i32, i32, i32
  }
  func.func @transform_5(%arg0: i32) -> (i32, i32, i32) {
    %c0_i32 = arith.constant 0 : i32
    %c0_i32_0 = arith.constant 0 : i32
    %c0_i32_1 = arith.constant 0 : i32
    return %arg0, %c0_i32, %c0_i32_0 : i32, i32, i32
  }
}

</mosaic_0001>

<llo_original>
// kernel: tpu_custom_call.1
$region0: #{tpu_custom_call.1}
  #allocation0 [shape = 'u32[]', space=smem, size = 0x4, offset = 0x4, fixed_abs, tag = 'smem constant byte address 0x4 - core index']
  #allocation1 [shape = 'u32[144,128]{1,0:T(1,128)}', space=vmem, size = 0x12000, scoped, tag = 'internal scratch']
  %s0 = inlined_call_operand.vmem [shape: f32[4,32,8], index: 0, kind: input, shape index: {}]
  %s1 = inlined_call_operand.vmem [shape: f32[1,1,8], index: 1, kind: input, shape index: {}]
  %s2 = inlined_call_operand.vmem [shape: f32[1,1,8], index: 2, kind: input, shape index: {}]
  %s3 = inlined_call_operand.vmem [shape: f32[4,32,8], index: 3, kind: output, shape index: {0}]
  %s4 = inlined_call_operand.hbm [shape: f32[4,1,8], index: 4, kind: output, shape index: {1}]
  %s5 = inlined_call_operand.hbm [shape: f32[4,1,8], index: 5, kind: output, shape index: {2}]
  %6 = xla_tuple %s3, %s4, %s5
  %s7 = sld [smem:[#allocation0]]
  $region61: #{tpu_custom_call.1} parent=0
    _
  %s9 = ssub.s32 1, %s7
  %s10 = scalar_select 0, %s9, %s7
  $region1: #{tpu_custom_call.1} parent=0
    #allocation2 [shape = 'u8[2048]{0}', space=vmem, size = 0x800, scoped, tag = 'output window, operand 1']
    #allocation3 [shape = 's32[2]{0}', space=sflag, size = 0x8, scoped, tag = 'scoped memory for tpu_custom_call.1']
    #allocation4 [shape = 'u8[2048]{0}', space=vmem, size = 0x800, scoped, tag = 'output window, operand 2']
    #allocation5 [shape = 's32[2]{0}', space=sflag, size = 0x8, scoped, tag = 'scoped memory for tpu_custom_call.1']
    %11 = vsyncpa [#allocation3], 0
    %s12 = scalar_lea.sflag [#allocation3], 1
    %13 = vsyncpa %s12, 0
    %14 = vsyncpa [#allocation5], 0
    %s15 = scalar_lea.sflag [#allocation5], 1
    %16 = vsyncpa %s15, 0
    loop: start=0, step=1, limit=4
    $region2: #{tpu_custom_call.1} parent=1 // loop_pre_header
      _
    $region3: #{tpu_custom_call.1} parent=1 // loop_header
      %s18 = sphi 0, %s22
      %p19 = scmp.ge.s32.totalorder %s18, 4
      %s28 = sphi 0, %s30
      %s31 = sphi 0, %s28
      %s32 = sphi 0, %s31
      %s48 = sphi 0, %s32
      %s52 = sphi 0, %s52
      %s54 = sphi 0, %s52
      %s55 = sphi 0, %s54
      %s69 = sphi 0, %s55
      %s73 = sphi 0, %s73
      %s75 = sphi 0, %s73
      %s76 = sphi 0, %s75
      %s90 = sphi 0, %s76
      %s96 = sphi 0, %s98
      %s99 = sphi 0, %s96
      %s100 = sphi 0, %s99
      %s116 = sphi 0, %s100
      %s122 = sphi 0, %s124
      %s125 = sphi 0, %s122
      %s126 = sphi 0, %s125
      %s142 = sphi 0, %s126
      %s148 = sphi 0, %s150
      %s151 = sphi 0, %s148
      %s152 = sphi 0, %s151
      %s168 = sphi 0, %s152
    $region4: #{tpu_custom_call.1} parent=1 // loop_header_branch
      %21 = sbr.rel (%p19) target = $region8
    $region5: #{tpu_custom_call.1} parent=1 // loop_body
      %s23 = ssub.s32 %s18, 1
      %s24 = ssub.s32 %s18, 2
      %s25 = sadd.s32 %s18, 1
      %s26 = ssub.s32 %s18, %s25
      %p27 = scmp.eq.s32.totalorder %s26, 0
      %s29 = sadd.s32 %s28, 1
      %s30 = scalar_select %p27, %s28, %s29
      %p33 = pneg %p27
      %p34 = scmp.eq.s32.totalorder %s18, 1
      %p35 = por %p33, %p34
      %p36 = scmp.ne.s32.totalorder %s28, %s31
      %p37 = scmp.eq.s32.totalorder %s18, 0
      %p38 = por %p36, %p37
      %p39 = scmp.ne.s32.totalorder %s28, %s31
      %p40 = scmp.eq.s32.totalorder %s23, 1
      %p41 = por %p39, %p40
      %p42 = scmp.ne.s32.totalorder %s31, %s32
      %p43 = scmp.eq.s32.totalorder %s23, 0
      %p44 = por %p42, %p43
      %p45 = scmp.ne.s32.totalorder %s31, %s32
      %p46 = scmp.eq.s32.totalorder %s24, 1
      %p47 = por %p45, %p46
      %p49 = scmp.ne.s32.totalorder %s32, %s48
      %p50 = scmp.eq.s32.totalorder %s24, 0
      %p51 = por %p49, %p50
      %s53 = sadd.s32 %s52, 1
      %p56 = scmp.eq.s32.totalorder %s18, 1
      %p57 = scmp.ne.s32.totalorder %s52, %s54
      %p58 = scmp.eq.s32.totalorder %s18, 0
      %p59 = por %p57, %p58
      %p60 = scmp.ne.s32.totalorder %s52, %s54
      %p61 = scmp.eq.s32.totalorder %s23, 1
      %p62 = por %p60, %p61
      %p63 = scmp.ne.s32.totalorder %s54, %s55
      %p64 = scmp.eq.s32.totalorder %s23, 0
      %p65 = por %p63, %p64
      %p66 = scmp.ne.s32.totalorder %s54, %s55
      %p67 = scmp.eq.s32.totalorder %s24, 1
      %p68 = por %p66, %p67
      %p70 = scmp.ne.s32.totalorder %s55, %s69
      %p71 = scmp.eq.s32.totalorder %s24, 0
      %p72 = por %p70, %p71
      %s74 = sadd.s32 %s73, 1
      %p77 = scmp.eq.s32.totalorder %s18, 1
      %p78 = scmp.ne.s32.totalorder %s73, %s75
      %p79 = scmp.eq.s32.totalorder %s18, 0
      %p80 = por %p78, %p79
      %p81 = scmp.ne.s32.totalorder %s73, %s75
      %p82 = scmp.eq.s32.totalorder %s23, 1
      %p83 = por %p81, %p82
      %p84 = scmp.ne.s32.totalorder %s75, %s76
      %p85 = scmp.eq.s32.totalorder %s23, 0
      %p86 = por %p84, %p85
      %p87 = scmp.ne.s32.totalorder %s75, %s76
      %p88 = scmp.eq.s32.totalorder %s24, 1
      %p89 = por %p87, %p88
      %p91 = scmp.ne.s32.totalorder %s76, %s90
      %p92 = scmp.eq.s32.totalorder %s24, 0
      %p93 = por %p91, %p92
      %s94 = ssub.s32 %s18, %s25
      %p95 = scmp.eq.s32.totalorder %s94, 0
      %s97 = sadd.s32 %s96, 1
      %s98 = scalar_select %p95, %s96, %s97
      %p101 = pneg %p95
      %p102 = scmp.eq.s32.totalorder %s18, 1
      %p103 = por %p101, %p102
      %p104 = scmp.ne.s32.totalorder %s96, %s99
      %p105 = scmp.eq.s32.totalorder %s18, 0
      %p106 = por %p104, %p105
      %p107 = scmp.ne.s32.totalorder %s96, %s99
      %p108 = scmp.eq.s32.totalorder %s23, 1
      %p109 = por %p107, %p108
      %p110 = scmp.ne.s32.totalorder %s99, %s100
      %p111 = scmp.eq.s32.totalorder %s23, 0
      %p112 = por %p110, %p111
      %p113 = scmp.ne.s32.totalorder %s99, %s100
      %p114 = scmp.eq.s32.totalorder %s24, 1
      %p115 = por %p113, %p114
      %p117 = scmp.ne.s32.totalorder %s100, %s116
      %p118 = scmp.eq.s32.totalorder %s24, 0
      %p119 = por %p117, %p118
      %s120 = ssub.s32 %s18, %s25
      %p121 = scmp.eq.s32.totalorder %s120, 0
      %s123 = sadd.s32 %s122, 1
      %s124 = scalar_select %p121, %s122, %s123
      %p127 = pneg %p121
      %p128 = scmp.eq.s32.totalorder %s18, 1
      %p129 = por %p127, %p128
      %p130 = scmp.ne.s32.totalorder %s122, %s125
      %p131 = scmp.eq.s32.totalorder %s18, 0
      %p132 = por %p130, %p131
      %p133 = scmp.ne.s32.totalorder %s122, %s125
      %p134 = scmp.eq.s32.totalorder %s23, 1
      %p135 = por %p133, %p134
      %p136 = scmp.ne.s32.totalorder %s125, %s126
      %p137 = scmp.eq.s32.totalorder %s23, 0
      %p138 = por %p136, %p137
      %p139 = scmp.ne.s32.totalorder %s125, %s126
      %p140 = scmp.eq.s32.totalorder %s24, 1
      %p141 = por %p139, %p140
      %p143 = scmp.ne.s32.totalorder %s126, %s142
      %p144 = scmp.eq.s32.totalorder %s24, 0
      %p145 = por %p143, %p144
      %s146 = ssub.s32 %s18, %s25
      %p147 = scmp.eq.s32.totalorder %s146, 0
      %s149 = sadd.s32 %s148, 1
      %s150 = scalar_select %p147, %s148, %s149
      %p153 = pneg %p147
      %p154 = scmp.eq.s32.totalorder %s18, 1
      %p155 = por %p153, %p154
      %p156 = scmp.ne.s32.totalorder %s148, %s151
      %p157 = scmp.eq.s32.totalorder %s18, 0
      %p158 = por %p156, %p157
      %p159 = scmp.ne.s32.totalorder %s148, %s151
      %p160 = scmp.eq.s32.totalorder %s23, 1
      %p161 = por %p159, %p160
      %p162 = scmp.ne.s32.totalorder %s151, %s152
      %p163 = scmp.eq.s32.totalorder %s23, 0
      %p164 = por %p162, %p163
      %p165 = scmp.ne.s32.totalorder %s151, %s152
      %p166 = scmp.eq.s32.totalorder %s24, 1
      %p167 = por %p165, %p166
      %p169 = scmp.ne.s32.totalorder %s152, %s168
      %p170 = scmp.eq.s32.totalorder %s24, 0
      %p171 = por %p169, %p170
      %p172 = scmp.le.s32.totalorder 1, %s18
      %p173 = scmp.lt.s32.totalorder %s18, 3
      %p174 = pnand %p172, %p173
      %p175 = pneg %p174
      // Predicated region
      $region9: #{tpu_custom_call.1} parent=5 // pred_check
        _
      $region10: #{tpu_custom_call.1} parent=5 // pred_check_branch
        %177 = sbr.rel (%p174) target = $region12
      $region11: #{tpu_custom_call.1} parent=5 // pred_region
        %s178 = ssub.s32 %s18, 1
        // Predicated region
        $region13: #{tpu_custom_call.1} parent=11 // pred_check
          %p179 = pneg %p65
        $region14: #{tpu_custom_call.1} parent=11 // pred_check_branch
          %181 = sbr.rel (%p179) target = $region16
        $region15: #{tpu_custom_call.1} parent=11 // pred_region
          _
        $region16: #{tpu_custom_call.1} parent=11 // pred_fallthru
          _
        // Predicated region
        $region17: #{tpu_custom_call.1} parent=11 // pred_check
          %p182 = pneg %p86
        $region18: #{tpu_custom_call.1} parent=11 // pred_check_branch
          %184 = sbr.rel (%p182) target = $region20
        $region19: #{tpu_custom_call.1} parent=11 // pred_region
          _
        $region20: #{tpu_custom_call.1} parent=11 // pred_fallthru
          _
      $region12: #{tpu_custom_call.1} parent=5 // pred_fallthru
        _
      %p185 = scmp.lt.s32.totalorder %s18, 2
      // Predicated region
      $region21: #{tpu_custom_call.1} parent=5 // pred_check
        %p186 = pneg %p185
      $region22: #{tpu_custom_call.1} parent=5 // pred_check_branch
        %188 = sbr.rel (%p186) target = $region24
      $region23: #{tpu_custom_call.1} parent=5 // pred_region
        // Predicated region
        $region25: #{tpu_custom_call.1} parent=23 // pred_check
          %p189 = pneg %p38
        $region26: #{tpu_custom_call.1} parent=23 // pred_check_branch
          %191 = sbr.rel (%p189) target = $region28
        $region27: #{tpu_custom_call.1} parent=23 // pred_region
          %s192 = smul.u32 2, %s18
          %p193 = scmp.lt.s32.totalorder %s192, 3
          %s194 = scalar_select %p193, %s192, 3
          %s195 = smul.addr %s194, 4
          %s196 = smul.addr %s195, 8
          %s197 = scalar_lea.vmem %s0, %s196
          %s198 = smul.u32 2, %s18
        $region28: #{tpu_custom_call.1} parent=23 // pred_fallthru
          _
      $region24: #{tpu_custom_call.1} parent=5 // pred_fallthru
        _
      %p199 = scmp.le.s32.totalorder 1, %s18
      %p200 = scmp.lt.s32.totalorder %s18, 3
      %p201 = pnand %p199, %p200
      %p202 = pneg %p201
      // Predicated region
      $region29: #{tpu_custom_call.1} parent=5 // pred_check
        _
      $region30: #{tpu_custom_call.1} parent=5 // pred_check_branch
        %204 = sbr.rel (%p201) target = $region32
      $region31: #{tpu_custom_call.1} parent=5 // pred_region
        %s205 = ssub.s32 %s18, 1
        %s206 = smul.u32 2, %s23
        %p207 = scmp.lt.s32.totalorder %s206, 3
        %s208 = scalar_select %p207, %s206, 3
        %s209 = smul.addr %s208, 4
        %s210 = smul.addr %s209, 8
        %s211 = scalar_lea.vmem %s0, %s210
        %p212 = pneg %p44
        %p213 = pneg %p41
        %p214 = pneg %p65
        %p215 = pneg %p62
        %p216 = pneg %p86
        %p217 = pneg %p83
        %p218 = pneg %p112
        %p219 = pneg %p109
        %s220 = smul.u32 2, %s23
        %p221 = scmp.lt.s32.totalorder %s220, 3
        %s222 = scalar_select %p221, %s220, 3
        %s223 = smul.addr %s222, 4
        %s224 = smul.addr %s223, 8
        %s225 = scalar_lea.vmem %s3, %s224
        %p226 = pneg %p138
        %p227 = pneg %p135
        %s228 = sand.u32 %s125, 1
        %s229 = scalar_lea.sflag [#allocation3], %s228
        %s230 = sand.u32 %s125, 1
        %s231 = smul.addr %s230, 2
        %s232 = scalar_lea.vmem [#allocation2], %s231
        %p233 = pneg %p164
        %p234 = pneg %p161
        %s235 = sand.u32 %s151, 1
        %s236 = scalar_lea.sflag [#allocation5], %s235
        %s237 = sand.u32 %s151, 1
        %s238 = smul.addr %s237, 2
        %s239 = scalar_lea.vmem [#allocation4], %s238
        %s240 = smul.u32 2, %s23
        %p241 = scmp.lt.s32.totalorder %s240, 3
        %s242 = scalar_select %p241, %s240, 3
        %s243 = smul.addr %s242, 4
        %s244 = smul.addr %s243, 8
        %s245 = scalar_lea.vmem %s0, %s244
        %s246 = smul.u32 2, %s23
        %s247 = smul.u32 2, %s23
        %p248 = scmp.lt.s32.totalorder %s247, 3
        %s249 = scalar_select %p248, %s247, 3
        %s250 = smul.addr %s249, 4
        %s251 = smul.addr %s250, 8
        %s252 = scalar_lea.vmem %s3, %s251
        %s253 = smul.u32 2, %s23
        %s254 = smul.u32 2, %s23
        %s255 = smul.u32 2, %s23
        %v256 = vld [vmem:[%s245] sm:$0xff]
        %v257 = vld [vmem:[%s245 + $0x8] sm:$0xff]
        %v258 = vld [vmem:[%s245 + $0x10] sm:$0xff]
        %v259 = vld [vmem:[%s245 + $0x18] sm:$0xff]
        %v260 = vld [vmem:[%s245 + $0x20] sm:$0xff]
        %v261 = vld [vmem:[%s245 + $0x28] sm:$0xff]
        %v262 = vld [vmem:[%s245 + $0x30] sm:$0xff]
        %v263 = vld [vmem:[%s245 + $0x38] sm:$0xff]
        %vm264 = vcmask 64512
        %v265 = vsel %vm264, %v256, 0.0
        %v266 = vsel %vm264, %v257, 0.0
        %v267 = vadd.f32 %v265, %v266
        %v268 = vsel %vm264, %v258, 0.0
        %v269 = vadd.f32 %v267, %v268
        %v270 = vsel %vm264, %v259, 0.0
        %v271 = vadd.f32 %v269, %v270
        %v272 = vrot.slane %v271, 4
        %v273 = vadd.f32 %v271, %v272
        %v274 = vrot.slane %v273, 2
        %v275 = vadd.f32 %v273, %v274
        %v276 = vrot.slane %v275, 1
        %v277 = vadd.f32 %v275, %v276
        %v278 = vsel %vm264, %v260, 0.0
        %v279 = vsel %vm264, %v261, 0.0
        %v280 = vadd.f32 %v278, %v279
        %v281 = vsel %vm264, %v262, 0.0
        %v282 = vadd.f32 %v280, %v281
        %v283 = vsel %vm264, %v263, 0.0
        %v284 = vadd.f32 %v282, %v283
        %v285 = vrot.slane %v284, 4
        %v286 = vadd.f32 %v284, %v285
        %v287 = vrot.slane %v286, 2
        %v288 = vadd.f32 %v286, %v287
        %v289 = vrot.slane %v288, 1
        %v290 = vadd.f32 %v288, %v289
        %v291 = vmul.f32 %v256, %v256
        %v292 = vmul.f32 %v257, %v257
        %v293 = vmul.f32 %v258, %v258
        %v294 = vmul.f32 %v259, %v259
        %v295 = vmul.f32 %v260, %v260
        %v296 = vmul.f32 %v261, %v261
        %v297 = vmul.f32 %v262, %v262
        %v298 = vmul.f32 %v263, %v263
        %v299 = vsel %vm264, %v291, 0.0
        %v300 = vsel %vm264, %v292, 0.0
        %v301 = vadd.f32 %v299, %v300
        %v302 = vsel %vm264, %v293, 0.0
        %v303 = vadd.f32 %v301, %v302
        %v304 = vsel %vm264, %v294, 0.0
        %v305 = vadd.f32 %v303, %v304
        %v306 = vrot.slane %v305, 4
        %v307 = vadd.f32 %v305, %v306
        %v308 = vrot.slane %v307, 2
        %v309 = vadd.f32 %v307, %v308
        %v310 = vrot.slane %v309, 1
        %v311 = vadd.f32 %v309, %v310
        %v312 = vsel %vm264, %v295, 0.0
        %v313 = vsel %vm264, %v296, 0.0
        %v314 = vadd.f32 %v312, %v313
        %v315 = vsel %vm264, %v297, 0.0
        %v316 = vadd.f32 %v314, %v315
        %v317 = vsel %vm264, %v298, 0.0
        %v318 = vadd.f32 %v316, %v317
        %v319 = vrot.slane %v318, 4
        %v320 = vadd.f32 %v318, %v319
        %v321 = vrot.slane %v320, 2
        %v322 = vadd.f32 %v320, %v321
        %v323 = vrot.slane %v322, 1
        %v324 = vadd.f32 %v322, %v323
        %v325 = vmul.f32 %v277, 0.03125
        %v326 = vmul.f32 %v290, 0.03125
        %v327 = vmul.f32 %v311, 0.03125
        %v328 = vmul.f32 %v324, 0.03125
        %v329 = vmul.f32 %v325, %v325
        %v330 = vmul.f32 %v326, %v326
        %v331 = vsub.f32 %v327, %v329
        %v332 = vsub.f32 %v328, %v330
        %v333 = vmax.f32 %v331, 0.0
        %v334 = vmax.f32 %v332, 0.0
        %v335 = vadd.f32 %v333, 1e-07
        %v336 = vadd.f32 %v334, 1e-07
        %v337 = vrsqrt.pop %v335
        %v338 = vmul.f32 %v335, %v337
        %vm339 = vcmp.eq.f32.partialorder %v335, inf
        %v340 = vsel %vm339, %v335, %v338
        %vm341 = vcmp.eq.f32.partialorder %v335, 0.0
        %v342 = vand.u32 %v335, 2147483648
        %v343 = vsel %vm341, %v342, %v340
        %v344 = vrsqrt.pop %v336
        %v345 = vmul.f32 %v336, %v344
        %vm346 = vcmp.eq.f32.partialorder %v336, inf
        %v347 = vsel %vm346, %v336, %v345
        %vm348 = vcmp.eq.f32.partialorder %v336, 0.0
        %v349 = vand.u32 %v336, 2147483648
        %v350 = vsel %vm348, %v349, %v347
        %v351 = vld [vmem:[%s1] sm:$0x1]
        %v352 = vld [vmem:[%s2] sm:$0x1]
        %v353 = vadd.f32 %v343, 1e-07
        %v354 = vadd.f32 %v350, 1e-07
        %v355 = vrcp.pop %v353
        %v356 = vmul.f32 %v351, %v355
        %v357 = vrcp.pop %v354
        %v358 = vmul.f32 %v351, %v357
        %v359 = vmul.f32 %v325, %v356
        %v360 = vmul.f32 %v326, %v358
        %v361 = vsub.f32 %v352, %v359
        %v362 = vsub.f32 %v352, %v360
        %v365 = vlaneseq
        %v366 = vshrl.u32 %v365, 7
        %v367 = vsub.s32 0, %v366
        %v368 = vrot.slane %v356, %v367
        %v369 = vlaneseq
        %v370 = vshrl.u32 %v369, 7
        %v371 = vsub.s32 0, %v370
        %v372 = vrot.slane %v358, %v371
        %v375 = vmul.f32 %v256, %v368
        %v376 = vmul.f32 %v257, %v368
        %v377 = vmul.f32 %v258, %v368
        %v378 = vmul.f32 %v259, %v368
        %v379 = vmul.f32 %v260, %v372
        %v380 = vmul.f32 %v261, %v372
        %v381 = vmul.f32 %v262, %v372
        %v382 = vmul.f32 %v263, %v372
        %v385 = vlaneseq
        %v386 = vshrl.u32 %v385, 7
        %v387 = vsub.s32 0, %v386
        %v388 = vrot.slane %v361, %v387
        %v389 = vlaneseq
        %v390 = vshrl.u32 %v389, 7
        %v391 = vsub.s32 0, %v390
        %v392 = vrot.slane %v362, %v391
        %v395 = vadd.f32 %v375, %v388
        %v396 = vadd.f32 %v376, %v388
        %v397 = vadd.f32 %v377, %v388
        %v398 = vadd.f32 %v378, %v388
        %v399 = vadd.f32 %v379, %v392
        %v400 = vadd.f32 %v380, %v392
        %v401 = vadd.f32 %v381, %v392
        %v402 = vadd.f32 %v382, %v392
        %403 = vst.msk [vmem:[%s252] sm:$0xff] %vm264, %v395
        %404 = vst.msk [vmem:[%s252 + $0x8] sm:$0xff] %vm264, %v396
        %405 = vst.msk [vmem:[%s252 + $0x10] sm:$0xff] %vm264, %v397
        %406 = vst.msk [vmem:[%s252 + $0x18] sm:$0xff] %vm264, %v398
        %407 = vst.msk [vmem:[%s252 + $0x20] sm:$0xff] %vm264, %v399
        %408 = vst.msk [vmem:[%s252 + $0x28] sm:$0xff] %vm264, %v400
        %409 = vst.msk [vmem:[%s252 + $0x30] sm:$0xff] %vm264, %v401
        %410 = vst.msk [vmem:[%s252 + $0x38] sm:$0xff] %vm264, %v402
        %vm411 = vcmask 57344
        %412 = vst.msk [vmem:[%s232] sm:$0x1] %vm411, %v325
        %413 = vst.msk [vmem:[%s232 + $0x1] sm:$0x1] %vm411, %v326
        %414 = vst.msk [vmem:[%s239] sm:$0x1] %vm411, %v343
        %415 = vst.msk [vmem:[%s239 + $0x1] sm:$0x1] %vm411, %v350
        %s416 = smul.u32 2, %s23
        %p417 = scmp.lt.s32.totalorder %s416, 3
        %s418 = scalar_select %p417, %s416, 3
        %s419 = smul.addr %s418, 4
        %s420 = smul.addr %s419, 8
        %s421 = scalar_lea.vmem %s3, %s420
        %s422 = sand.u32 %s125, 1
        %s423 = scalar_lea.sflag [#allocation3], %s422
        %s424 = sand.u32 %s125, 1
        %s425 = smul.addr %s424, 2
        %s426 = scalar_lea.vmem [#allocation2], %s425
        %s427 = sand.u32 %s151, 1
        %s428 = scalar_lea.sflag [#allocation5], %s427
        %s429 = sand.u32 %s151, 1
        %s430 = smul.addr %s429, 2
        %s431 = scalar_lea.vmem [#allocation4], %s430
        // Predicated region
        $region33: #{tpu_custom_call.1} parent=31 // pred_check
          %p432 = pneg %p109
        $region34: #{tpu_custom_call.1} parent=31 // pred_check_branch
          %434 = sbr.rel (%p432) target = $region36
        $region35: #{tpu_custom_call.1} parent=31 // pred_region
          %s435 = smul.u32 2, %s23
        $region36: #{tpu_custom_call.1} parent=31 // pred_fallthru
          _
        // Predicated region
        $region37: #{tpu_custom_call.1} parent=31 // pred_check
          %p436 = pneg %p135
        $region38: #{tpu_custom_call.1} parent=31 // pred_check_branch
          %438 = sbr.rel (%p436) target = $region40
        $region39: #{tpu_custom_call.1} parent=31 // pred_region
          %s439 = smul.u32 2, %s23
          %s441 = ssub.s32 32, 32
          %442 = vsyncadd %s423, %s441
          %s443 = smul.addr %s439, 16
          %s444 = scalar_lea.hbm %s4, %s443
          %s445 = sshll.u32 %s426, 4
          %s446 = int_to_ptr.vmem [resolvable:$true] %s445
          %451 = dma.vmem_to_hbm [thread:$0]  %s446, 32, %s444, %s423, 16, 16, 1
        $region40: #{tpu_custom_call.1} parent=31 // pred_fallthru
          _
        // Predicated region
        $region41: #{tpu_custom_call.1} parent=31 // pred_check
          %p452 = pneg %p161
        $region42: #{tpu_custom_call.1} parent=31 // pred_check_branch
          %454 = sbr.rel (%p452) target = $region44
        $region43: #{tpu_custom_call.1} parent=31 // pred_region
          %s455 = smul.u32 2, %s23
          %s457 = ssub.s32 32, 32
          %458 = vsyncadd %s428, %s457
          %s459 = smul.addr %s455, 16
          %s460 = scalar_lea.hbm %s5, %s459
          %s461 = sshll.u32 %s431, 4
          %s462 = int_to_ptr.vmem [resolvable:$true] %s461
          %467 = dma.vmem_to_hbm [thread:$0]  %s462, 32, %s460, %s428, 16, 16, 1
        $region44: #{tpu_custom_call.1} parent=31 // pred_fallthru
          _
      $region32: #{tpu_custom_call.1} parent=5 // pred_fallthru
        _
      %p468 = scmp.le.s32.totalorder 2, %s18
      // Predicated region
      $region45: #{tpu_custom_call.1} parent=5 // pred_check
        %p469 = pneg %p468
      $region46: #{tpu_custom_call.1} parent=5 // pred_check_branch
        %471 = sbr.rel (%p469) target = $region48
      $region47: #{tpu_custom_call.1} parent=5 // pred_region
        %s472 = ssub.s32 %s18, 2
        // Predicated region
        $region49: #{tpu_custom_call.1} parent=47 // pred_check
          %p473 = pneg %p115
        $region50: #{tpu_custom_call.1} parent=47 // pred_check_branch
          %475 = sbr.rel (%p473) target = $region52
        $region51: #{tpu_custom_call.1} parent=47 // pred_region
          %s476 = smul.u32 2, %s24
          %p477 = scmp.lt.s32.totalorder %s476, 3
          %s478 = scalar_select %p477, %s476, 3
          %s479 = smul.addr %s478, 4
          %s480 = smul.addr %s479, 8
          %s481 = scalar_lea.vmem %s3, %s480
        $region52: #{tpu_custom_call.1} parent=47 // pred_fallthru
          _
        // Predicated region
        $region53: #{tpu_custom_call.1} parent=47 // pred_check
          %p482 = pneg %p141
        $region54: #{tpu_custom_call.1} parent=47 // pred_check_branch
          %484 = sbr.rel (%p482) target = $region56
        $region55: #{tpu_custom_call.1} parent=47 // pred_region
          %s485 = sand.u32 %s126, 1
          %s486 = scalar_lea.sflag [#allocation3], %s485
          %s487 = sand.u32 %s126, 1
          %s488 = smul.addr %s487, 2
          %s489 = scalar_lea.vmem [#allocation2], %s488
          %490 = dma.done %s486, 32
        $region56: #{tpu_custom_call.1} parent=47 // pred_fallthru
          _
        // Predicated region
        $region57: #{tpu_custom_call.1} parent=47 // pred_check
          %p491 = pneg %p167
        $region58: #{tpu_custom_call.1} parent=47 // pred_check_branch
          %493 = sbr.rel (%p491) target = $region60
        $region59: #{tpu_custom_call.1} parent=47 // pred_region
          %s494 = sand.u32 %s152, 1
          %s495 = scalar_lea.sflag [#allocation5], %s494
          %s496 = sand.u32 %s152, 1
          %s497 = smul.addr %s496, 2
          %s498 = scalar_lea.vmem [#allocation4], %s497
          %499 = dma.done %s495, 32
        $region60: #{tpu_custom_call.1} parent=47 // pred_fallthru
          _
      $region48: #{tpu_custom_call.1} parent=5 // pred_fallthru
        _
    $region6: #{tpu_custom_call.1} parent=1 // loop_footer
      %s22 = sadd.s32 1, %s18
    $region7: #{tpu_custom_call.1} parent=1 // loop_footer_branch
      %17 = sbr.rel target = $region3
    $region8: #{tpu_custom_call.1} parent=1 // loop_exit
      _
    %500 = vsyncpa [#allocation3], 1
    %s501 = scalar_lea.sflag [#allocation3], 1
    %502 = vsyncpa %s501, 1
    %503 = vsyncpa [#allocation5], 1
    %s504 = scalar_lea.sflag [#allocation5], 1
    %505 = vsyncpa %s504, 1

</llo_original>
